<compile_context>
chip_gen: v5e
topology: v5e:2x2
jax: 0.10.0
libtpu: 0.0.40
codegen_flags: <defaults>
</compile_context>

<pallas_src>
from functools import partial

import jax
import jax.numpy as jnp
from jax.experimental import pallas as pl
from jax.experimental.pallas import tpu as pltpu


def _round_up(x, m):
    return (x + m - 1) // m * m


_SINGLE_BLOCK_MAX_B = 512   # below this: one block / one grid step (latency path)
_MAX_BLOCK_B = 4096         # batch-tile cap (VMEM-safe on v5e/v6e and v7x's 64 MiB)


def _make_dqn_kernel(in_p, c, n_actions):
    """relu(x@W1+b1) -> relu(.@W2+b2) -> .@W3+b3 ; bf16 MXU operands, f32 accum."""

    def kernel(x_ref, w_ref, b_ref, out_ref):
        # Cast activations to bf16 only for the MXU; elementwise math stays f32.
        x = x_ref[...].astype(jnp.bfloat16)            # (block_b, in_p)
        # Static, 16-row-aligned slices of the packed bf16 weight buffer.
        w1 = w_ref[0:in_p, :]                          # (in_p, c)
        w2 = w_ref[in_p:in_p + c, :]                   # (c, c)
        w3 = w_ref[in_p + c:in_p + 2 * c, :]           # (c, c)
        b1 = b_ref[0:1, :]                             # (1, c) f32
        b2 = b_ref[1:2, :]
        b3 = b_ref[2:3, :]

        h = jnp.dot(x, w1, preferred_element_type=jnp.float32) + b1
        h = jnp.maximum(h, 0.0)
        h = jnp.dot(h.astype(jnp.bfloat16), w2,
                    preferred_element_type=jnp.float32) + b2
        h = jnp.maximum(h, 0.0)
        out = jnp.dot(h.astype(jnp.bfloat16), w3,
                      preferred_element_type=jnp.float32) + b3
        # Store only the valid action lanes (narrow output: ~32x less HBM write).
        out_ref[...] = out[:, :n_actions].astype(out_ref.dtype)

    return kernel


def pack_params(params):
    """One-time packing of PyTorch-convention params into MXU-ready buffers.

    params: w1:(h1,in) b1:(h1,)  w2:(h2,h1) b2:(h2,)  w3:(na,h2) b3:(na,)
    returns:
      w_packed: (in_p + 2*c, c) bf16  -- [W1.T ; W2.T ; W3.T], zero padded
      b_packed: (8, c) f32            -- rows 0/1/2 = b1/b2/b3, zero padded
    with c = round_up(max(h1,h2,na), 128) and in_p = round_up(in, 16)
    (16-row alignment keeps every bf16 segment sublane-pack aligned).
    """
    w1, b1 = params["w1"], params["b1"]
    w2, b2 = params["w2"], params["b2"]
    w3, b3 = params["w3"], params["b3"]
    in_dim = w1.shape[1]
    h1, h2, n_act = w1.shape[0], w2.shape[0], w3.shape[0]

    c = _round_up(max(h1, h2, n_act), 128)
    in_p = _round_up(in_dim, 16)

    def pad_to(a, rows, cols):
        return jnp.pad(a, ((0, rows - a.shape[0]), (0, cols - a.shape[1])))

    w_packed = jnp.concatenate(
        [
            pad_to(w1.T.astype(jnp.float32), in_p, c),   # (in_p, c)
            pad_to(w2.T.astype(jnp.float32), c, c),      # (c, c)
            pad_to(w3.T.astype(jnp.float32), c, c),      # (c, c)
        ],
        axis=0,
    ).astype(jnp.bfloat16)

    b_packed = jnp.zeros((8, c), jnp.float32)
    b_packed = (
        b_packed.at[0, :h1].set(b1.astype(jnp.float32))
        .at[1, :h2].set(b2.astype(jnp.float32))
        .at[2, :n_act].set(b3.astype(jnp.float32))
    )
    return w_packed, b_packed


@partial(jax.jit, static_argnames=("n_actions",))
def dqn_forward(state, w_packed, b_packed, *, n_actions):
    """Q-values for `state` using pre-packed params. Returns (B, n_actions) f32."""
    B, in_dim = state.shape
    c = w_packed.shape[1]
    in_p = w_packed.shape[0] - 2 * c

    x = state.astype(jnp.float32)
    if in_dim != in_p:                       # feature pad only if actually needed
        x = jnp.pad(x, ((0, 0), (0, in_p - in_dim)))

    # Batch tiling: single block for small B (latency); otherwise >=2 parallel
    # blocks (v7x dual-TC) capped at _MAX_BLOCK_B rows. Trailing partial block is
    # handled by Pallas, so no batch padding copy is emitted.
    if B < _SINGLE_BLOCK_MAX_B:
        block_b = B
    else:
        block_b = min(_MAX_BLOCK_B, _round_up(pl.cdiv(B, 2), 8))
    grid = pl.cdiv(B, block_b)

    out = pl.pallas_call(
        _make_dqn_kernel(in_p, c, n_actions),
        out_shape=jax.ShapeDtypeStruct((B, n_actions), jnp.float32),
        grid=(grid,),
        in_specs=[
            pl.BlockSpec((block_b, in_p), lambda i: (i, 0)),       # x batch tile
            pl.BlockSpec((in_p + 2 * c, c), lambda i: (0, 0)),     # packed weights (resident)
            pl.BlockSpec((8, c), lambda i: (0, 0)),                # packed biases (resident)
        ],
        out_specs=pl.BlockSpec((block_b, n_actions), lambda i: (i, 0)),
        compiler_params=pltpu.CompilerParams(
            dimension_semantics=("parallel",)),
    )(x, w_packed, b_packed)

    return out


def init_params(key, input_dim, h1, h2, n_actions):
    """Deterministic synthetic init (uniform, roughly PyTorch's Linear init)."""
    ks = jax.random.split(key, 6)

    def lin(kw, kb, fan_in, fan_out):
        bound = 1.0 / jnp.sqrt(fan_in)
        w = jax.random.uniform(kw, (fan_out, fan_in), jnp.float32, -bound, bound)
        b = jax.random.uniform(kb, (fan_out,), jnp.float32, -bound, bound)
        return w, b

    w1, b1 = lin(ks[0], ks[1], input_dim, h1)
    w2, b2 = lin(ks[2], ks[3], h1, h2)
    w3, b3 = lin(ks[4], ks[5], h2, n_actions)
    return {"w1": w1, "b1": b1, "w2": w2, "b2": b2, "w3": w3, "b3": b3}


def ref_forward(state, params, operand_dtype=jnp.float32):
    """Pure-JAX reference. With operand_dtype=bfloat16 it emulates the kernel's
    bf16-operand / f32-accumulate matmuls (tight numerical check)."""
    def q(a):
        return a.astype(operand_dtype).astype(jnp.float32)

    h = jnp.maximum(q(state) @ q(params["w1"]).T + params["b1"], 0.0)
    h = jnp.maximum(q(h) @ q(params["w2"]).T + params["b2"], 0.0)
    return q(h) @ q(params["w3"]).T + params["b3"]


if __name__ == "__main__":
    # Shapes consistent with DeepQNetwork(lr, input_dims=(8,), 32, 32, 4)
    batch, input_dim, h1, h2, n_actions = 8, 8, 32, 32, 4

    key = jax.random.PRNGKey(0)
    k_params, k_state, k_big = jax.random.split(key, 3)
    params = init_params(k_params, input_dim, h1, h2, n_actions)

    # Pack once (hoisted out of the per-call forward).
    w_packed, b_packed = pack_params(params)

    # --- small batch: single-block latency path ---
    state = jax.random.normal(k_state, (batch, input_dim), jnp.float32)
    actions = dqn_forward(state, w_packed, b_packed, n_actions=n_actions)
    jax.block_until_ready(actions)
    assert actions.shape == (batch, n_actions)
    ref_bf = ref_forward(state, params, operand_dtype=jnp.bfloat16)
    ref_f32 = ref_forward(state, params)
    assert jnp.allclose(actions, ref_bf, atol=5e-3, rtol=5e-3)     # tight, vs bf16-operand ref
    assert jnp.allclose(actions, ref_f32, atol=2e-2, rtol=2e-2)    # loose, vs true f32 module

    # --- large batch: gridded "parallel" path (>=2 blocks, partial trailing block) ---
    big_b = 2500
    state_big = jax.random.normal(k_big, (big_b, input_dim), jnp.float32)
    actions_big = dqn_forward(state_big, w_packed, b_packed, n_actions=n_actions)
    jax.block_until_ready(actions_big)
    assert actions_big.shape == (big_b, n_actions)
    ref_bf_big = ref_forward(state_big, params, operand_dtype=jnp.bfloat16)
    ref_f32_big = ref_forward(state_big, params)
    assert jnp.allclose(actions_big, ref_bf_big, atol=5e-3, rtol=5e-3)
    assert jnp.allclose(actions_big, ref_f32_big, atol=2e-2, rtol=2e-2)

    print("KERNEL_OK")
</pallas_src>

<mosaic_0001>
module attributes {stable_mosaic.version = 11 : i64} {
  func.func @kernel(%arg0: i32, %arg1: memref<8x16xf32, #tpu.memory_space<vmem>>, %arg2: memref<272x128xbf16, #tpu.memory_space<vmem>>, %arg3: memref<8x128xf32, #tpu.memory_space<vmem>>, %arg4: memref<8x4xf32, #tpu.memory_space<vmem>>) attributes {dimension_semantics = [#tpu.dimension_semantics<parallel>], iteration_bounds = array<i64: 1>, scalar_prefetch = 0 : i64, scratch_operands = 0 : i64, tpu.core_type = #tpu.core_type<tc>, window_params = [{transform_indices = @transform_0, window_bounds = array<i64: 8, 16>}, {pipeline_mode = #tpu.pipeline_mode<synchronous>, transform_indices = @transform_1, window_bounds = array<i64: 272, 128>}, {pipeline_mode = #tpu.pipeline_mode<synchronous>, transform_indices = @transform_2, window_bounds = array<i64: 8, 128>}, {transform_indices = @transform_3, window_bounds = array<i64: 8, 4>}]} {
    %c0 = arith.constant 0 : index
    %c0_0 = arith.constant 0 : index
    %0 = vector.load %arg1[%c0, %c0_0] : memref<8x16xf32, #tpu.memory_space<vmem>>, vector<8x16xf32>
    %1 = arith.truncf %0 : vector<8x16xf32> to vector<8x16xbf16>
    %c0_1 = arith.constant 0 : index
    %c0_2 = arith.constant 0 : index
    %2 = vector.load %arg2[%c0_1, %c0_2] : memref<272x128xbf16, #tpu.memory_space<vmem>>, vector<16x128xbf16>
    %c16 = arith.constant 16 : index
    %c0_3 = arith.constant 0 : index
    %3 = vector.load %arg2[%c16, %c0_3] : memref<272x128xbf16, #tpu.memory_space<vmem>>, vector<128x128xbf16>
    %c144 = arith.constant 144 : index
    %c0_4 = arith.constant 0 : index
    %4 = vector.load %arg2[%c144, %c0_4] : memref<272x128xbf16, #tpu.memory_space<vmem>>, vector<128x128xbf16>
    %c0_5 = arith.constant 0 : index
    %c0_6 = arith.constant 0 : index
    %5 = vector.load %arg3[%c0_5, %c0_6] : memref<8x128xf32, #tpu.memory_space<vmem>>, vector<1x128xf32>
    %c1 = arith.constant 1 : index
    %c0_7 = arith.constant 0 : index
    %6 = vector.load %arg3[%c1, %c0_7] : memref<8x128xf32, #tpu.memory_space<vmem>>, vector<1x128xf32>
    %c2 = arith.constant 2 : index
    %c0_8 = arith.constant 0 : index
    %7 = vector.load %arg3[%c2, %c0_8] : memref<8x128xf32, #tpu.memory_space<vmem>>, vector<1x128xf32>
    %cst = arith.constant dense<0.000000e+00> : vector<8x128xf32>
    %8 = tpu.matmul %1, %2, %cst {dimension_numbers = #tpu.dot_dimension_numbers<[1], [0], [0], [1], [0, 0, 1, 1], [], []>} : vector<8x16xbf16>, vector<16x128xbf16>, vector<8x128xf32> -> vector<8x128xf32>
    %9 = vector.broadcast %5 : vector<1x128xf32> to vector<8x128xf32>
    %10 = arith.addf %8, %9 : vector<8x128xf32>
    %cst_9 = arith.constant 0.000000e+00 : f32
    %11 = vector.broadcast %cst_9 : f32 to vector<8x128xf32>
    %12 = arith.maximumf %10, %11 : vector<8x128xf32>
    %13 = arith.truncf %12 : vector<8x128xf32> to vector<8x128xbf16>
    %cst_10 = arith.constant dense<0.000000e+00> : vector<8x128xf32>
    %14 = tpu.matmul %13, %3, %cst_10 {dimension_numbers = #tpu.dot_dimension_numbers<[1], [0], [0], [1], [0, 0, 1, 1], [], []>} : vector<8x128xbf16>, vector<128x128xbf16>, vector<8x128xf32> -> vector<8x128xf32>
    %15 = vector.broadcast %6 : vector<1x128xf32> to vector<8x128xf32>
    %16 = arith.addf %14, %15 : vector<8x128xf32>
    %cst_11 = arith.constant 0.000000e+00 : f32
    %17 = vector.broadcast %cst_11 : f32 to vector<8x128xf32>
    %18 = arith.maximumf %16, %17 : vector<8x128xf32>
    %19 = arith.truncf %18 : vector<8x128xf32> to vector<8x128xbf16>
    %cst_12 = arith.constant dense<0.000000e+00> : vector<8x128xf32>
    %20 = tpu.matmul %19, %4, %cst_12 {dimension_numbers = #tpu.dot_dimension_numbers<[1], [0], [0], [1], [0, 0, 1, 1], [], []>} : vector<8x128xbf16>, vector<128x128xbf16>, vector<8x128xf32> -> vector<8x128xf32>
    %21 = vector.broadcast %7 : vector<1x128xf32> to vector<8x128xf32>
    %22 = arith.addf %20, %21 : vector<8x128xf32>
    %23 = vector.extract_strided_slice %22 {offsets = [0, 0], sizes = [8, 4], strides = [1, 1]} : vector<8x128xf32> to vector<8x4xf32>
    %c0_13 = arith.constant 0 : index
    %c0_14 = arith.constant 0 : index
    %24 = vector.load %arg4[%c0_13, %c0_14] : memref<8x4xf32, #tpu.memory_space<vmem>>, vector<8x4xf32>
    tpu.vector_store %arg4[%c0_13, %c0_14], %23 {strides = array<i32>} : memref<8x4xf32, #tpu.memory_space<vmem>>, vector<8x4xf32>,
    return
  }
  func.func @transform_0(%arg0: i32) -> (i32, i32) {
    %c0_i32 = arith.constant 0 : i32
    %c0_i32_0 = arith.constant 0 : i32
    return %arg0, %c0_i32 : i32, i32
  }
  func.func @transform_1(%arg0: i32) -> (i32, i32) {
    %c0_i32 = arith.constant 0 : i32
    %c0_i32_0 = arith.constant 0 : i32
    %c0_i32_1 = arith.constant 0 : i32
    return %c0_i32, %c0_i32_0 : i32, i32
  }
  func.func @transform_2(%arg0: i32) -> (i32, i32) {
    %c0_i32 = arith.constant 0 : i32
    %c0_i32_0 = arith.constant 0 : i32
    %c0_i32_1 = arith.constant 0 : i32
    return %c0_i32, %c0_i32_0 : i32, i32
  }
  func.func @transform_3(%arg0: i32) -> (i32, i32) {
    %c0_i32 = arith.constant 0 : i32
    %c0_i32_0 = arith.constant 0 : i32
    return %arg0, %c0_i32 : i32, i32
  }
}

</mosaic_0001>

<llo_original>
// kernel: dqn_forward.1
$region0: #{dqn_forward.1}
  #allocation0 [shape = 'u32[]', space=smem, size = 0x4, offset = 0x4, fixed_abs, tag = 'smem constant byte address 0x4 - core index']
  #allocation1 [shape = 'u32[72,128]{1,0:T(1,128)}', space=vmem, size = 0x9000, scoped, tag = 'internal scratch']
  %s0 = inlined_call_operand.vmem [shape: f32[8,16], index: 0, kind: input, shape index: {}]
  %s1 = inlined_call_operand.hbm [shape: bf16[272,128], index: 1, kind: input, shape index: {}]
  %s2 = inlined_call_operand.vmem [shape: f32[8,128], index: 2, kind: input, shape index: {}]
  %s3 = inlined_call_operand.vmem [shape: f32[8,4], index: 3, kind: output, shape index: {}]
  %s4 = sld [smem:[#allocation0]]
  $region26: #{dqn_forward.1} parent=0
    _
  %s6 = ssub.s32 1, %s4
  %s7 = scalar_select 0, %s6, %s4
  $region1: #{dqn_forward.1} parent=0
    #allocation2 [shape = 'u8[69632]{0}', space=vmem, size = 0x11000, scoped, tag = 'input window, operand 1, single buffered']
    #allocation3 [shape = 's32[1]{0}', space=sflag, size = 0x4, scoped, tag = 'scoped memory for dqn_forward.1']
    %8 = vsyncpa [#allocation3], 0
    // Predicated region
    $region2: #{dqn_forward.1} parent=1 // pred_check
      _
    $region3: #{dqn_forward.1} parent=1 // pred_check_branch
      %10 = sbr.rel (0) target = $region5
    $region4: #{dqn_forward.1} parent=1 // pred_region
      _
    $region5: #{dqn_forward.1} parent=1 // pred_fallthru
      _
    // Predicated region
    $region6: #{dqn_forward.1} parent=1 // pred_check
      _
    $region7: #{dqn_forward.1} parent=1 // pred_check_branch
      %12 = sbr.rel (0) target = $region9
    $region8: #{dqn_forward.1} parent=1 // pred_region
      %14 = vsyncadd [#allocation3], 0
      %s15 = sshll.u32 %s1, 4
      %s16 = int_to_ptr.hbm [resolvable:$true] %s15
      %s17 = sshll.u32 [#allocation2], 4
      %s18 = int_to_ptr.vmem [resolvable:$true] %s17
      %23 = dma.hbm_to_vmem [thread:$0]  %s16, 2176, %s18, [#allocation3], 64, 64, 4
    $region9: #{dqn_forward.1} parent=1 // pred_fallthru
      _
    // Predicated region
    $region10: #{dqn_forward.1} parent=1 // pred_check
      _
    $region11: #{dqn_forward.1} parent=1 // pred_check_branch
      %25 = sbr.rel (0) target = $region13
    $region12: #{dqn_forward.1} parent=1 // pred_region
      _
    $region13: #{dqn_forward.1} parent=1 // pred_fallthru
      _
    // Predicated region
    $region14: #{dqn_forward.1} parent=1 // pred_check
      _
    $region15: #{dqn_forward.1} parent=1 // pred_check_branch
      %27 = sbr.rel (0) target = $region17
    $region16: #{dqn_forward.1} parent=1 // pred_region
      %29 = dma.done [#allocation3], 2176
    $region17: #{dqn_forward.1} parent=1 // pred_fallthru
      _
    %v31 = vld [vmem:[%s0] sm:$0xff]
    %v32 = vpack.c.bf16 %v31, %v31
    %v33 = vld [vmem:[#allocation2] sm:$0xf]
    %v34 = vld [vmem:[#allocation2 + $0x4] sm:$0xf]
    %v35 = vld [vmem:[#allocation2 + $0x8] sm:$0xf]
    %v36 = vld [vmem:[#allocation2 + $0xc] sm:$0xf]
    %v37 = vld [vmem:[#allocation2 + $0x10] sm:$0xf]
    %v38 = vld [vmem:[#allocation2 + $0x14] sm:$0xf]
    %v39 = vld [vmem:[#allocation2 + $0x18] sm:$0xf]
    %v40 = vld [vmem:[#allocation2 + $0x1c] sm:$0xf]
    %v41 = vld [vmem:[#allocation2 + $0x20] sm:$0xf]
    %v42 = vld [vmem:[#allocation2 + $0x24] sm:$0xf]
    %v43 = vld [vmem:[#allocation2 + $0x28] sm:$0xf]
    %v44 = vld [vmem:[#allocation2 + $0x2c] sm:$0xf]
    %v45 = vld [vmem:[#allocation2 + $0x30] sm:$0xf]
    %v46 = vld [vmem:[#allocation2 + $0x34] sm:$0xf]
    %v47 = vld [vmem:[#allocation2 + $0x38] sm:$0xf]
    %v48 = vld [vmem:[#allocation2 + $0x3c] sm:$0xf]
    %v49 = vld [vmem:[#allocation2 + $0x40] sm:$0xf]
    %v50 = vld [vmem:[#allocation2 + $0x44] sm:$0xf]
    %v51 = vld [vmem:[#allocation2 + $0x48] sm:$0xf]
    %v52 = vld [vmem:[#allocation2 + $0x4c] sm:$0xf]
    %v53 = vld [vmem:[#allocation2 + $0x50] sm:$0xf]
    %v54 = vld [vmem:[#allocation2 + $0x54] sm:$0xf]
    %v55 = vld [vmem:[#allocation2 + $0x58] sm:$0xf]
    %v56 = vld [vmem:[#allocation2 + $0x5c] sm:$0xf]
    %v57 = vld [vmem:[#allocation2 + $0x60] sm:$0xf]
    %v58 = vld [vmem:[#allocation2 + $0x64] sm:$0xf]
    %v59 = vld [vmem:[#allocation2 + $0x68] sm:$0xf]
    %v60 = vld [vmem:[#allocation2 + $0x6c] sm:$0xf]
    %v61 = vld [vmem:[#allocation2 + $0x70] sm:$0xf]
    %v62 = vld [vmem:[#allocation2 + $0x74] sm:$0xf]
    %v63 = vld [vmem:[#allocation2 + $0x78] sm:$0xf]
    %v64 = vld [vmem:[#allocation2 + $0x7c] sm:$0xf]
    %v65 = vld [vmem:[#allocation2 + $0x80] sm:$0xf]
    %v66 = vld [vmem:[#allocation2 + $0x84] sm:$0xf]
    %v67 = vld [vmem:[%s2] sm:$0x1]
    %v68 = vld [vmem:[%s2 + $0x1] sm:$0x1]
    %v69 = vld [vmem:[%s2 + $0x2] sm:$0x1]
    %v70 = vperm.slane %v67, 0
    %v73 = vunpack.c.l.b16 %v33
    %v74 = vunpack.c.l.b16 %v34
    %v75 = vpack.c.b16 %v74, %v73
    %vm77 = vcmask 130048
    %v79 = vsel %vm77, %v32, 0
    %81 = vmatpush.bf16.msra.mxu0 0
    %82 = vmatpush.bf16.msra.mxu0 0
    %83 = vmatpush.bf16.msra.mxu0 0
    %84 = vmatpush.bf16.msra.mxu0 0
    %85 = vmatpush.bf16.msra.mxu0 0
    %86 = vmatpush.bf16.msra.mxu0 0
    %87 = vmatpush.bf16.msra.mxu0 0
    %88 = vmatpush.bf16.msra.mxu0 %v75
    %89 = vmatmul.bf16.gmra.mxu0 %v79
    %v90 = vpop.f32.mrf.mxu0
    %v91 = vadd.f32 %v70, %v90
    %v92 = vpop.f32.mrf.mxu0
    %93 = vdwg.mxu0
    %v94 = vmax.f32 %v91, 0.0
    %v95 = vpack.c.bf16 %v94, %v94
    %v96 = vperm.slane %v68, 0
    %v113 = vunpack.c.l.b16 %v35
    %v114 = vunpack.c.l.b16 %v36
    %v115 = vunpack.c.l.b16 %v37
    %v116 = vunpack.c.l.b16 %v38
    %v117 = vunpack.c.l.b16 %v39
    %v118 = vunpack.c.l.b16 %v40
    %v119 = vunpack.c.l.b16 %v41
    %v120 = vunpack.c.l.b16 %v42
    %v121 = vunpack.c.l.b16 %v43
    %v122 = vunpack.c.l.b16 %v44
    %v123 = vunpack.c.l.b16 %v45
    %v124 = vunpack.c.l.b16 %v46
    %v125 = vunpack.c.l.b16 %v47
    %v126 = vunpack.c.l.b16 %v48
    %v127 = vunpack.c.l.b16 %v49
    %v128 = vunpack.c.l.b16 %v50
    %v129 = vpack.c.b16 %v114, %v113
    %v130 = vpack.c.b16 %v116, %v115
    %v131 = vpack.c.b16 %v118, %v117
    %v132 = vpack.c.b16 %v120, %v119
    %v133 = vpack.c.b16 %v122, %v121
    %v134 = vpack.c.b16 %v124, %v123
    %v135 = vpack.c.b16 %v126, %v125
    %v136 = vpack.c.b16 %v128, %v127
    %145 = vmatpush.bf16.msra.mxu0 %v136
    %146 = vmatpush.bf16.msra.mxu0 %v135
    %147 = vmatpush.bf16.msra.mxu0 %v134
    %148 = vmatpush.bf16.msra.mxu0 %v133
    %149 = vmatpush.bf16.msra.mxu0 %v132
    %150 = vmatpush.bf16.msra.mxu0 %v131
    %151 = vmatpush.bf16.msra.mxu0 %v130
    %152 = vmatpush.bf16.msra.mxu0 %v129
    %153 = vmatmul.bf16.gmra.mxu0 %v95
    %v154 = vpop.f32.mrf.mxu0
    %v155 = vadd.f32 %v96, %v154
    %v156 = vpop.f32.mrf.mxu0
    %157 = vdwg.mxu0
    %v158 = vmax.f32 %v155, 0.0
    %v159 = vpack.c.bf16 %v158, %v158
    %v160 = vperm.slane %v69, 0
    %v177 = vunpack.c.l.b16 %v51
    %v178 = vunpack.c.l.b16 %v52
    %v179 = vunpack.c.l.b16 %v53
    %v180 = vunpack.c.l.b16 %v54
    %v181 = vunpack.c.l.b16 %v55
    %v182 = vunpack.c.l.b16 %v56
    %v183 = vunpack.c.l.b16 %v57
    %v184 = vunpack.c.l.b16 %v58
    %v185 = vunpack.c.l.b16 %v59
    %v186 = vunpack.c.l.b16 %v60
    %v187 = vunpack.c.l.b16 %v61
    %v188 = vunpack.c.l.b16 %v62
    %v189 = vunpack.c.l.b16 %v63
    %v190 = vunpack.c.l.b16 %v64
    %v191 = vunpack.c.l.b16 %v65
    %v192 = vunpack.c.l.b16 %v66
    %v193 = vpack.c.b16 %v178, %v177
    %v194 = vpack.c.b16 %v180, %v179
    %v195 = vpack.c.b16 %v182, %v181
    %v196 = vpack.c.b16 %v184, %v183
    %v197 = vpack.c.b16 %v186, %v185
    %v198 = vpack.c.b16 %v188, %v187
    %v199 = vpack.c.b16 %v190, %v189
    %v200 = vpack.c.b16 %v192, %v191
    %209 = vmatpush.bf16.msra.mxu0 %v200
    %210 = vmatpush.bf16.msra.mxu0 %v199
    %211 = vmatpush.bf16.msra.mxu0 %v198
    %212 = vmatpush.bf16.msra.mxu0 %v197
    %213 = vmatpush.bf16.msra.mxu0 %v196
    %214 = vmatpush.bf16.msra.mxu0 %v195
    %215 = vmatpush.bf16.msra.mxu0 %v194
    %216 = vmatpush.bf16.msra.mxu0 %v193
    %217 = vmatmul.bf16.gmra.mxu0 %v159
    %v218 = vpop.f32.mrf.mxu0
    %v219 = vadd.f32 %v160, %v218
    %v220 = vpop.f32.mrf.mxu0
    %221 = vdwg.mxu0
    %vm222 = vcmask 31744
    %223 = vst.msk [vmem:[%s3] sm:$0xff] %vm222, %v219
    // Predicated region
    $region18: #{dqn_forward.1} parent=1 // pred_check
      _
    $region19: #{dqn_forward.1} parent=1 // pred_check_branch
      %225 = sbr.rel (0) target = $region21
    $region20: #{dqn_forward.1} parent=1 // pred_region
      _
    $region21: #{dqn_forward.1} parent=1 // pred_fallthru
      _
    // Predicated region
    $region22: #{dqn_forward.1} parent=1 // pred_check
      _
    $region23: #{dqn_forward.1} parent=1 // pred_check_branch
      %227 = sbr.rel (0) target = $region25
    $region24: #{dqn_forward.1} parent=1 // pred_region
      _
    $region25: #{dqn_forward.1} parent=1 // pred_fallthru
      _
    %228 = vsyncpa [#allocation3], 1

</llo_original>
